<compile_context>
chip_gen: v7x
topology: tpu7x:2x2x1
jax: 0.10.0
libtpu: 0.0.40
codegen_flags: <defaults>
</compile_context>

<pallas_src>
import functools

import jax
import jax.numpy as jnp
from jax.experimental import pallas as pl
from jax.experimental.pallas import tpu as pltpu


# ---------------------------------------------------------------------------
# Generic tiled matmul + bias kernel (used for the input and output projections)
# ---------------------------------------------------------------------------
def _matmul_bias_kernel(x_ref, w_ref, b_ref, o_ref, acc_ref):
    k = pl.program_id(2)

    @pl.when(k == 0)
    def _():
        acc_ref[...] = jnp.zeros_like(acc_ref)

    acc_ref[...] += jnp.dot(x_ref[...], w_ref[...],
                            preferred_element_type=jnp.float32)

    @pl.when(k == pl.num_programs(2) - 1)
    def _():
        o_ref[...] = (acc_ref[...] + b_ref[...]).astype(o_ref.dtype)


def _pick_tile(dim, prefs):
    """Largest preferred tile that divides `dim`; otherwise the full dim."""
    for p in prefs:
        if dim % p == 0:
            return p
    return dim


def matmul_bias(x, w, b, *, out_dtype=jnp.float32):
    """(M,K) @ (K,N) + (N,) -> (M,N), f32 accumulation, fully parallel tiles."""
    M, K = x.shape
    K2, N = w.shape
    assert K == K2, (x.shape, w.shape)
    tm = _pick_tile(M, (256, 128, 64, 32, 16, 8))
    tn = _pick_tile(N, (512, 256, 128))
    tk = _pick_tile(K, (512, 256, 128))
    b2 = b.reshape(1, N).astype(jnp.float32)

    return pl.pallas_call(
        _matmul_bias_kernel,
        out_shape=jax.ShapeDtypeStruct((M, N), out_dtype),
        grid=(M // tm, N // tn, K // tk),
        in_specs=[
            pl.BlockSpec((tm, tk), lambda i, j, k: (i, k)),   # x tile
            pl.BlockSpec((tk, tn), lambda i, j, k: (k, j)),   # w tile
            pl.BlockSpec((1, tn), lambda i, j, k: (0, j)),    # bias tile
        ],
        out_specs=pl.BlockSpec((tm, tn), lambda i, j, k: (i, j)),
        scratch_shapes=[pltpu.VMEM((tm, tn), jnp.float32)],
        compiler_params=pltpu.CompilerParams(
            dimension_semantics=("parallel", "parallel", "arbitrary")),
    )(x, w, b2)


# ---------------------------------------------------------------------------
# Sequential LSTM recurrence kernel (only the W_hh matmul + gate math per step)
# ---------------------------------------------------------------------------
def _lstm_recurrence_kernel(gx_ref, whh_ref, h_out_ref, h_scr, c_scr):
    """gx_ref: (Tc, B, 4H) precomputed x-gates; h_out_ref: (Tc, B, H)."""
    blk = pl.program_id(0)

    @pl.when(blk == 0)
    def _():
        h_scr[...] = jnp.zeros_like(h_scr)
        c_scr[...] = jnp.zeros_like(c_scr)

    H = h_scr.shape[-1]
    Tc = gx_ref.shape[0]
    whh = whh_ref[...]                      # (H, 4H), matmul (compute) dtype

    def step(i, carry):
        h, c = carry                        # f32 (B, H) — kept in vregs
        gates = gx_ref[i] + jnp.dot(h.astype(whh.dtype), whh,
                                    preferred_element_type=jnp.float32)
        # PyTorch LSTM gate order: input, forget, cell, output — all math in f32.
        i_g = jax.nn.sigmoid(gates[:, 0 * H:1 * H])
        f_g = jax.nn.sigmoid(gates[:, 1 * H:2 * H])
        g_g = jnp.tanh(gates[:, 2 * H:3 * H])
        o_g = jax.nn.sigmoid(gates[:, 3 * H:4 * H])
        c_new = f_g * c + i_g * g_g
        h_new = o_g * jnp.tanh(c_new)
        h_out_ref[i] = h_new.astype(h_out_ref.dtype)
        return h_new, c_new

    h, c = jax.lax.fori_loop(0, Tc, step, (h_scr[...], c_scr[...]), unroll=True)
    h_scr[...] = h
    c_scr[...] = c


def _pick_time_chunk(T, max_chunk=16):
    c = min(T, max_chunk)
    while T % c:
        c -= 1
    return c


def lstm_recurrence(gates_x_tm, w_hh_t, *, hidden_size, out_dtype=jnp.float32):
    """gates_x_tm: (T, B, 4H) time-major. Returns hidden states (T, B, H)."""
    T, B, G = gates_x_tm.shape
    H = hidden_size
    Tc = _pick_time_chunk(T)

    # TODO(synk): at production sizes, single-buffer the resident W_hh block
    # (pipeline_mode=pl.Buffered(1)) and pad H to a multiple of 128 so the gate
    # slices are lane-aligned.
    return pl.pallas_call(
        _lstm_recurrence_kernel,
        out_shape=jax.ShapeDtypeStruct((T, B, H), out_dtype),
        grid=(T // Tc,),
        in_specs=[
            pl.BlockSpec((Tc, B, G), lambda t: (t, 0, 0)),   # precomputed x-gates
            pl.BlockSpec((H, G), lambda t: (0, 0)),          # W_hh^T (resident)
        ],
        out_specs=pl.BlockSpec((Tc, B, H), lambda t: (t, 0, 0)),
        scratch_shapes=[
            pltpu.VMEM((B, H), jnp.float32),   # h carry (f32)
            pltpu.VMEM((B, H), jnp.float32),   # c carry (f32)
        ],
        compiler_params=pltpu.CompilerParams(
            dimension_semantics=("arbitrary",)),  # time recurrence is sequential
    )(gates_x_tm, w_hh_t)


# ---------------------------------------------------------------------------
# DecoderRNN forward (embedding/concat are XLA glue; everything else is Pallas)
# ---------------------------------------------------------------------------
def init_params(key, embed_size, hidden_size, vocab_size):
    k = jax.random.split(key, 7)
    scale = 0.1
    return {
        "embedding": scale * jax.random.normal(k[0], (vocab_size, embed_size), jnp.float32),
        "w_ih": scale * jax.random.normal(k[1], (4 * hidden_size, embed_size), jnp.float32),
        "w_hh": scale * jax.random.normal(k[2], (4 * hidden_size, hidden_size), jnp.float32),
        "b_ih": scale * jax.random.normal(k[3], (4 * hidden_size,), jnp.float32),
        "b_hh": scale * jax.random.normal(k[4], (4 * hidden_size,), jnp.float32),
        "w_lin": scale * jax.random.normal(k[5], (vocab_size, hidden_size), jnp.float32),
        "b_lin": scale * jax.random.normal(k[6], (vocab_size,), jnp.float32),
    }


def decoder_rnn_forward(features, captions, params, compute_dtype=jnp.float32):
    """features: (B, E), captions: (B, L) int32. Returns logits (B, L, V)."""
    # glue: embedding gather + prepend image features as the first token
    cap = captions[:, :-1]                                     # (B, L-1)
    emb = jnp.take(params["embedding"], cap, axis=0)           # (B, L-1, E)
    x = jnp.concatenate([features[:, None, :], emb], axis=1)   # (B, T, E)
    B, T, E = x.shape
    H = params["w_hh"].shape[1]
    V = params["w_lin"].shape[0]
    cd = compute_dtype

    w_ih_t = params["w_ih"].T.astype(cd)                       # (E, 4H)
    w_hh_t = params["w_hh"].T.astype(cd)                       # (H, 4H)
    bias = (params["b_ih"] + params["b_hh"]).astype(jnp.float32)
    w_lin_t = params["w_lin"].T.astype(cd)                     # (H, V)
    b_lin = params["b_lin"].astype(jnp.float32)

    # 1) input projection for all time steps at once (hoisted out of the loop)
    x2d = x.reshape(B * T, E).astype(cd)
    gates_x = matmul_bias(x2d, w_ih_t, bias, out_dtype=jnp.float32)   # (B*T, 4H)
    gates_x_tm = gates_x.reshape(B, T, 4 * H).transpose(1, 0, 2)      # (T, B, 4H)

    # 2) sequential recurrence — only W_hh matmul + gate math per step
    hiddens_tm = lstm_recurrence(gates_x_tm, w_hh_t,
                                 hidden_size=H, out_dtype=cd)         # (T, B, H)

    # 3) output projection — fully parallel; logits already batch-first
    hiddens2d = hiddens_tm.transpose(1, 0, 2).reshape(B * T, H)       # (B*T, H)
    logits = matmul_bias(hiddens2d, w_lin_t, b_lin, out_dtype=jnp.float32)
    return logits.reshape(B, T, V)                                    # (B, T, V)


def decoder_rnn_reference(features, captions, params):
    """Pure-JAX reference (PyTorch LSTM semantics) for validation."""
    cap = captions[:, :-1]
    emb = jnp.take(params["embedding"], cap, axis=0)
    x = jnp.concatenate([features[:, None, :], emb], axis=1)  # (B, T, E)
    B, T, E = x.shape
    H = params["w_hh"].shape[1]

    w_ih_t, w_hh_t = params["w_ih"].T, params["w_hh"].T
    bias = params["b_ih"] + params["b_hh"]

    def step(carry, x_t):
        h, c = carry
        gates = x_t @ w_ih_t + h @ w_hh_t + bias
        i = jax.nn.sigmoid(gates[:, 0 * H:1 * H])
        f = jax.nn.sigmoid(gates[:, 1 * H:2 * H])
        g = jnp.tanh(gates[:, 2 * H:3 * H])
        o = jax.nn.sigmoid(gates[:, 3 * H:4 * H])
        c = f * c + i * g
        h = o * jnp.tanh(c)
        return (h, c), h

    h0 = jnp.zeros((B, H), jnp.float32)
    c0 = jnp.zeros((B, H), jnp.float32)
    _, hs = jax.lax.scan(step, (h0, c0), jnp.transpose(x, (1, 0, 2)))
    hiddens = jnp.transpose(hs, (1, 0, 2))                    # (B, T, H)
    return hiddens @ params["w_lin"].T + params["b_lin"]


if __name__ == "__main__":
    embed_size = 32
    hidden_size = 32
    vocab_size = 64
    batch = 2
    seq_len = 8   # decoder consumes features + captions[:, :-1] -> T = seq_len

    key = jax.random.PRNGKey(0)
    kp, kf, kc = jax.random.split(key, 3)

    params = init_params(kp, embed_size, hidden_size, vocab_size)
    features = jax.random.normal(kf, (batch, embed_size), jnp.float32)
    captions = jax.random.randint(kc, (batch, seq_len), 0, vocab_size, dtype=jnp.int32)

    ref = decoder_rnn_reference(features, captions, params)

    # f32 path: tight check against the reference
    out_f32 = decoder_rnn_forward(features, captions, params,
                                  compute_dtype=jnp.float32)
    out_f32 = jax.block_until_ready(out_f32)
    assert out_f32.shape == (batch, seq_len, vocab_size), out_f32.shape
    assert jnp.allclose(out_f32, ref, atol=2e-4, rtol=2e-4), "f32 mismatch vs reference"

    # bf16-matmul path (v6e/v7x MXU): f32 accumulation + f32 gate math, loose check
    out_bf16 = decoder_rnn_forward(features, captions, params,
                                   compute_dtype=jnp.bfloat16)
    out_bf16 = jax.block_until_ready(out_bf16)
    assert out_bf16.shape == (batch, seq_len, vocab_size), out_bf16.shape
    assert jnp.allclose(out_bf16, ref, atol=1e-1, rtol=1e-1), "bf16 mismatch vs reference"

    print("KERNEL_OK")
</pallas_src>

<mosaic_0001>
module attributes {stable_mosaic.version = 11 : i64} {
  func.func @_matmul_bias_kernel(%arg0: i32, %arg1: i32, %arg2: i32, %arg3: memref<16x32xf32, #tpu.memory_space<vmem>>, %arg4: memref<32x128xf32, #tpu.memory_space<vmem>>, %arg5: memref<1x128xf32, #tpu.memory_space<vmem>>, %arg6: memref<16x128xf32, #tpu.memory_space<vmem>>, %arg7: memref<16x128xf32, #tpu.memory_space<vmem>>) attributes {dimension_semantics = [#tpu.dimension_semantics<parallel>, #tpu.dimension_semantics<parallel>, #tpu.dimension_semantics<arbitrary>], iteration_bounds = array<i64: 1, 1, 1>, scalar_prefetch = 0 : i64, scratch_operands = 1 : i64, tpu.core_type = #tpu.core_type<tc>, window_params = [{transform_indices = @transform_0, window_bounds = array<i64: 16, 32>}, {transform_indices = @transform_1, window_bounds = array<i64: 32, 128>}, {transform_indices = @transform_2, window_bounds = array<i64: 1, 128>}, {transform_indices = @transform_3, window_bounds = array<i64: 16, 128>}]} {
    %c0_i32 = arith.constant 0 : i32
    %0 = arith.cmpi eq, %arg2, %c0_i32 : i32
    %1 = arith.extui %0 : i1 to i32
    %c0_i32_0 = arith.constant 0 : i32
    %2 = arith.cmpi ne, %1, %c0_i32_0 : i32
    scf.if %2 {
      %cst_10 = arith.constant 0.000000e+00 : f32
      %12 = vector.broadcast %cst_10 : f32 to vector<16x128xf32>
      %c0_11 = arith.constant 0 : index
      %c0_12 = arith.constant 0 : index
      %13 = vector.load %arg7[%c0_11, %c0_12] : memref<16x128xf32, #tpu.memory_space<vmem>>, vector<16x128xf32>
      tpu.vector_store %arg7[%c0_11, %c0_12], %12 {strides = array<i32>} : memref<16x128xf32, #tpu.memory_space<vmem>>, vector<16x128xf32>,
    } else {
    }
    %c0 = arith.constant 0 : index
    %c0_1 = arith.constant 0 : index
    %3 = vector.load %arg7[%c0, %c0_1] : memref<16x128xf32, #tpu.memory_space<vmem>>, vector<16x128xf32>
    %c0_2 = arith.constant 0 : index
    %c0_3 = arith.constant 0 : index
    %4 = vector.load %arg3[%c0_2, %c0_3] : memref<16x32xf32, #tpu.memory_space<vmem>>, vector<16x32xf32>
    %c0_4 = arith.constant 0 : index
    %c0_5 = arith.constant 0 : index
    %5 = vector.load %arg4[%c0_4, %c0_5] : memref<32x128xf32, #tpu.memory_space<vmem>>, vector<32x128xf32>
    %cst = arith.constant dense<0.000000e+00> : vector<16x128xf32>
    %6 = tpu.matmul %4, %5, %cst {dimension_numbers = #tpu.dot_dimension_numbers<[1], [0], [0], [1], [0, 0, 1, 1], [], []>} : vector<16x32xf32>, vector<32x128xf32>, vector<16x128xf32> -> vector<16x128xf32>
    %7 = arith.addf %3, %6 : vector<16x128xf32>
    %c0_6 = arith.constant 0 : index
    %c0_7 = arith.constant 0 : index
    %8 = vector.load %arg7[%c0_6, %c0_7] : memref<16x128xf32, #tpu.memory_space<vmem>>, vector<16x128xf32>
    tpu.vector_store %arg7[%c0_6, %c0_7], %7 {strides = array<i32>} : memref<16x128xf32, #tpu.memory_space<vmem>>, vector<16x128xf32>,
    %c0_i32_8 = arith.constant 0 : i32
    %9 = arith.cmpi eq, %arg2, %c0_i32_8 : i32
    %10 = arith.extui %9 : i1 to i32
    %c0_i32_9 = arith.constant 0 : i32
    %11 = arith.cmpi ne, %10, %c0_i32_9 : i32
    scf.if %11 {
      %c0_10 = arith.constant 0 : index
      %c0_11 = arith.constant 0 : index
      %12 = vector.load %arg7[%c0_10, %c0_11] : memref<16x128xf32, #tpu.memory_space<vmem>>, vector<16x128xf32>
      %c0_12 = arith.constant 0 : index
      %c0_13 = arith.constant 0 : index
      %13 = vector.load %arg5[%c0_12, %c0_13] : memref<1x128xf32, #tpu.memory_space<vmem>>, vector<1x128xf32>
      %14 = vector.broadcast %13 : vector<1x128xf32> to vector<16x128xf32>
      %15 = arith.addf %12, %14 : vector<16x128xf32>
      %c0_14 = arith.constant 0 : index
      %c0_15 = arith.constant 0 : index
      %16 = vector.load %arg6[%c0_14, %c0_15] : memref<16x128xf32, #tpu.memory_space<vmem>>, vector<16x128xf32>
      tpu.vector_store %arg6[%c0_14, %c0_15], %15 {strides = array<i32>} : memref<16x128xf32, #tpu.memory_space<vmem>>, vector<16x128xf32>,
    } else {
    }
    return
  }
  func.func @transform_0(%arg0: i32, %arg1: i32, %arg2: i32) -> (i32, i32) {
    %c0_i32 = arith.constant 0 : i32
    return %arg0, %arg2 : i32, i32
  }
  func.func @transform_1(%arg0: i32, %arg1: i32, %arg2: i32) -> (i32, i32) {
    %c0_i32 = arith.constant 0 : i32
    return %arg2, %arg1 : i32, i32
  }
  func.func @transform_2(%arg0: i32, %arg1: i32, %arg2: i32) -> (i32, i32) {
    %c0_i32 = arith.constant 0 : i32
    %c0_i32_0 = arith.constant 0 : i32
    return %c0_i32, %arg1 : i32, i32
  }
  func.func @transform_3(%arg0: i32, %arg1: i32, %arg2: i32) -> (i32, i32) {
    %c0_i32 = arith.constant 0 : i32
    return %arg0, %arg1 : i32, i32
  }
}

</mosaic_0001>

<llo_original>
// kernel: tpu_custom_call.1
$region0: #{tpu_custom_call.1}
  #allocation0 [shape = 'u32[]', space=smem, size = 0x4, offset = 0x4, fixed_abs, tag = 'smem constant byte address 0x4 - core index']
  #allocation1 [shape = 'u32[144,128]{1,0:T(1,128)}', space=vmem, size = 0x12000, scoped, tag = 'internal scratch']
  #allocation2 [shape = 'f32[16,128]{1,0:T(8,128)}', space=vmem, size = 0x2000, scoped, tag = 'scratch operand']
  %s0 = inlined_call_operand.hbm [shape: f32[16,32], index: 0, kind: input, shape index: {}]
  %s1 = inlined_call_operand.hbm [shape: f32[32,128], index: 1, kind: input, shape index: {}]
  %s2 = inlined_call_operand.vmem [shape: f32[1,128], index: 2, kind: input, shape index: {}]
  %s3 = inlined_call_operand.hbm [shape: f32[16,128], index: 3, kind: output, shape index: {}]
  %s4 = sld [smem:[#allocation0]]
  $region38: #{tpu_custom_call.1} parent=0
    _
  %s6 = ssub.s32 1, %s4
  %s7 = scalar_select 0, %s6, %s4
  $region1: #{tpu_custom_call.1} parent=0
    #allocation3 [shape = 'u8[8192]{0}', space=vmem, size = 0x2000, scoped, tag = 'input window, operand 0, single buffered']
    #allocation4 [shape = 's32[1]{0}', space=sflag, size = 0x4, scoped, tag = 'scoped memory for tpu_custom_call.1']
    #allocation5 [shape = 's32[1]{0}', space=sflag, size = 0x4, scoped, tag = 'scoped memory for tpu_custom_call.1']
    #allocation6 [shape = 'u8[16384]{0}', space=vmem, size = 0x4000, scoped, tag = 'input window, operand 1, single buffered']
    #allocation7 [shape = 's32[1]{0}', space=sflag, size = 0x4, scoped, tag = 'scoped memory for tpu_custom_call.1']
    #allocation8 [shape = 'u8[8192]{0}', space=vmem, size = 0x2000, scoped, tag = 'output window, operand 0, single buffered']
    %8 = vsyncpa [#allocation4], 0
    %9 = vsyncpa [#allocation7], 0
    %10 = vsyncpa [#allocation5], 0
    // Predicated region
    $region2: #{tpu_custom_call.1} parent=1 // pred_check
      _
    $region3: #{tpu_custom_call.1} parent=1 // pred_check_branch
      %12 = sbr.rel (0) target = $region5
    $region4: #{tpu_custom_call.1} parent=1 // pred_region
      %s14 = ssub.s32 256, 256
      %15 = vsyncadd [#allocation4], %s14
      %s16 = sshll.u32 [#allocation3], 4
      %s17 = int_to_ptr.vmem [resolvable:$true] %s16
      %22 = dma.hbm_to_vmem [thread:$0]  %s0, 256, %s17, [#allocation4], 128, 128, 8
    $region5: #{tpu_custom_call.1} parent=1 // pred_fallthru
      _
    // Predicated region
    $region6: #{tpu_custom_call.1} parent=1 // pred_check
      _
    $region7: #{tpu_custom_call.1} parent=1 // pred_check_branch
      %24 = sbr.rel (0) target = $region9
    $region8: #{tpu_custom_call.1} parent=1 // pred_region
      %s26 = ssub.s32 512, 512
      %27 = vsyncadd [#allocation7], %s26
      %s28 = sshll.u32 [#allocation6], 4
      %s29 = int_to_ptr.vmem [resolvable:$true] %s28
      %34 = dma.hbm_to_vmem [thread:$0]  %s1, 512, %s29, [#allocation7], 128, 128, 8
    $region9: #{tpu_custom_call.1} parent=1 // pred_fallthru
      _
    // Predicated region
    $region10: #{tpu_custom_call.1} parent=1 // pred_check
      _
    $region11: #{tpu_custom_call.1} parent=1 // pred_check_branch
      %36 = sbr.rel (0) target = $region13
    $region12: #{tpu_custom_call.1} parent=1 // pred_region
      _
    $region13: #{tpu_custom_call.1} parent=1 // pred_fallthru
      _
    // Predicated region
    $region14: #{tpu_custom_call.1} parent=1 // pred_check
      _
    $region15: #{tpu_custom_call.1} parent=1 // pred_check_branch
      %38 = sbr.rel (0) target = $region17
    $region16: #{tpu_custom_call.1} parent=1 // pred_region
      %39 = dma.done [#allocation4], 256
    $region17: #{tpu_custom_call.1} parent=1 // pred_fallthru
      _
    // Predicated region
    $region18: #{tpu_custom_call.1} parent=1 // pred_check
      _
    $region19: #{tpu_custom_call.1} parent=1 // pred_check_branch
      %41 = sbr.rel (0) target = $region21
    $region20: #{tpu_custom_call.1} parent=1 // pred_region
      %42 = dma.done [#allocation7], 512
    $region21: #{tpu_custom_call.1} parent=1 // pred_fallthru
      _
    %p43 = scmp.eq.s32.totalorder 0, 0
    // Predicated region
    $region22: #{tpu_custom_call.1} parent=1 // pred_check
      %p44 = pneg %p43
    $region23: #{tpu_custom_call.1} parent=1 // pred_check_branch
      %46 = sbr.rel (%p44) target = $region25
    $region24: #{tpu_custom_call.1} parent=1 // pred_region
      %47 = vst [vmem:[#allocation2] sm:$0xff] 0.0
      %48 = vst [vmem:[#allocation2 + $0x8] sm:$0xff] 0.0
    $region25: #{tpu_custom_call.1} parent=1 // pred_fallthru
      _
    %v49 = vld [vmem:[#allocation2] sm:$0xff]
    %v50 = vld [vmem:[#allocation2 + $0x8] sm:$0xff]
    %v51 = vld [vmem:[#allocation3] sm:$0xff]
    %v52 = vld [vmem:[#allocation3 + $0x8] sm:$0xff]
    %v53 = vld [vmem:[#allocation6] sm:$0xff]
    %v54 = vld [vmem:[#allocation6 + $0x8] sm:$0xff]
    %v55 = vld [vmem:[#allocation6 + $0x10] sm:$0xff]
    %v56 = vld [vmem:[#allocation6 + $0x18] sm:$0xff]
    %vm57 = vcmask 261120
    %v59 = vsel %vm57, %v51, 0
    %v62 = vsel %vm57, %v52, 0
    %64 = vmatprep.subr.mxu0 0.0
    %65 = vmatpush1.msra.mxu0 %v53
    %66 = vmatprep.subr.mxu0 0.0
    %67 = vmatpush1.msra.mxu0 %v54
    %68 = vmatprep.subr.mxu0 0.0
    %69 = vmatpush1.msra.mxu0 %v55
    %70 = vmatprep.subr.mxu0 0.0
    %71 = vmatpush1.msra.mxu0 %v56
    %72 = vmatprep.subr.mxu0 0.0
    %73 = vmatpush1.msra.mxu0 0.0
    %74 = vmatprep.subr.mxu0 0.0
    %75 = vmatpush1.msra.mxu0 0.0
    %76 = vmatprep.subr.mxu0 0.0
    %77 = vmatpush1.msra.mxu0 0.0
    %78 = vmatprep.subr.mxu0 0.0
    %79 = vmatpush1.msra.mxu0 0.0
    %80 = vmatprep.subr.mxu0 0.0
    %81 = vmatpush1.msra.mxu0 0.0
    %82 = vmatprep.subr.mxu0 0.0
    %83 = vmatpush1.msra.mxu0 0.0
    %84 = vmatprep.subr.mxu0 0.0
    %85 = vmatpush1.msra.mxu0 0.0
    %86 = vmatprep.subr.mxu0 0.0
    %87 = vmatpush1.msra.mxu0 0.0
    %88 = vmatprep.subr.mxu0 0.0
    %89 = vmatpush1.msra.mxu0 0.0
    %90 = vmatprep.subr.mxu0 0.0
    %91 = vmatpush1.msra.mxu0 0.0
    %92 = vmatprep.subr.mxu0 0.0
    %93 = vmatpush1.msra.mxu0 0.0
    %94 = vmatprep.subr.mxu0 0.0
    %95 = vmatpush1.msra.mxu0 0.0
    %96 = vmatprep.subr.mxu0 0.0
    %97 = vmatpush1.msra.mxu0 0.0
    %98 = vmatprep.subr.mxu0 0.0
    %99 = vmatpush1.msra.mxu0 0.0
    %100 = vmatprep.subr.mxu0 0.0
    %101 = vmatpush1.msra.mxu0 0.0
    %102 = vmatprep.subr.mxu0 0.0
    %103 = vmatpush1.msra.mxu0 0.0
    %104 = vmatprep.subr.mxu0 0.0
    %105 = vmatpush1.msra.mxu0 0.0
    %106 = vmatprep.subr.mxu0 0.0
    %107 = vmatpush1.msra.mxu0 0.0
    %108 = vmatprep.subr.mxu0 0.0
    %109 = vmatpush1.msra.mxu0 0.0
    %110 = vmatprep.subr.mxu0 0.0
    %111 = vmatpush1.msra.mxu0 0.0
    %112 = vmatprep.subr.mxu0 0.0
    %113 = vmatpush1.msra.mxu0 0.0
    %114 = vmatprep.subr.mxu0 0.0
    %115 = vmatpush1.msra.mxu0 0.0
    %116 = vmatprep.subr.mxu0 0.0
    %117 = vmatpush1.msra.mxu0 0.0
    %118 = vmatprep.subr.mxu0 0.0
    %119 = vmatpush1.msra.mxu0 0.0
    %120 = vmatprep.subr.mxu0 0.0
    %121 = vmatpush1.msra.mxu0 0.0
    %122 = vmatprep.subr.mxu0 0.0
    %123 = vmatpush1.msra.mxu0 0.0
    %124 = vmatprep.subr.mxu0 0.0
    %125 = vmatpush1.msra.mxu0 0.0
    %126 = vmatprep.subr.mxu0 0.0
    %127 = vmatpush1.msra.mxu0 0.0
    %128 = vmatprep.mubr.f32.mxu0 0.0
    %129 = vmatmul.mubr.f32.gmra.mrb[0].mxu0 %v59
    %v130 = vpop.f32.mrb[0].mxu0
    %v131 = vadd.f32 0.0, %v130
    %v132 = vpop.f32.mrb[0].mxu0
    %133 = vmatprep.mubr.f32.mxu0 0.0
    %134 = vmatmul.mubr.f32.gmra.mrb[0].mxu0 %v62
    %v135 = vpop.f32.mrb[0].mxu0
    %v136 = vadd.f32 0.0, %v135
    %v137 = vpop.f32.mrb[0].mxu0
    %138 = vdwg.mxu0
    %v139 = vadd.f32 %v49, %v131
    %v140 = vadd.f32 %v50, %v136
    %141 = vst [vmem:[#allocation2] sm:$0xff] %v139
    %142 = vst [vmem:[#allocation2 + $0x8] sm:$0xff] %v140
    // Predicated region
    $region26: #{tpu_custom_call.1} parent=1 // pred_check
      %p143 = pneg %p43
    $region27: #{tpu_custom_call.1} parent=1 // pred_check_branch
      %145 = sbr.rel (%p143) target = $region29
    $region28: #{tpu_custom_call.1} parent=1 // pred_region
      %v146 = vld [vmem:[#allocation2] sm:$0xff]
      %v147 = vld [vmem:[#allocation2 + $0x8] sm:$0xff]
      %v148 = vld [vmem:[%s2] sm:$0x1]
      %v150 = vlaneseq
      %v151 = vshrl.u32 %v150, 7
      %v152 = vsub.s32 0, %v151
      %v153 = vrot.slane %v148, %v152
      %v155 = vadd.f32 %v146, %v153
      %v156 = vadd.f32 %v147, %v153
      %157 = vst [vmem:[#allocation8] sm:$0xff] %v155
      %158 = vst [vmem:[#allocation8 + $0x8] sm:$0xff] %v156
    $region29: #{tpu_custom_call.1} parent=1 // pred_fallthru
      _
    // Predicated region
    $region30: #{tpu_custom_call.1} parent=1 // pred_check
      _
    $region31: #{tpu_custom_call.1} parent=1 // pred_check_branch
      %160 = sbr.rel (0) target = $region33
    $region32: #{tpu_custom_call.1} parent=1 // pred_region
      %s162 = ssub.s32 256, 256
      %163 = vsyncadd [#allocation5], %s162
      %s164 = sshll.u32 [#allocation8], 4
      %s165 = int_to_ptr.vmem [resolvable:$true] %s164
      %170 = dma.vmem_to_hbm [thread:$0]  %s165, 256, %s3, [#allocation5], 128, 128, 8
    $region33: #{tpu_custom_call.1} parent=1 // pred_fallthru
      _
    // Predicated region
    $region34: #{tpu_custom_call.1} parent=1 // pred_check
      _
    $region35: #{tpu_custom_call.1} parent=1 // pred_check_branch
      %172 = sbr.rel (0) target = $region37
    $region36: #{tpu_custom_call.1} parent=1 // pred_region
      %173 = dma.done [#allocation5], 256
    $region37: #{tpu_custom_call.1} parent=1 // pred_fallthru
      _
    %174 = vsyncpa [#allocation4], 1
    %175 = vsyncpa [#allocation7], 1
    %176 = vsyncpa [#allocation5], 1

</llo_original>
